<compile_context>
chip_gen: v7x
topology: tpu7x:2x2x1
jax: 0.10.0
libtpu: 0.0.40
codegen_flags: <defaults>
</compile_context>

<pallas_src>
import functools
import math

import jax
import jax.numpy as jnp
from jax.experimental import pallas as pl
from jax.experimental.pallas import tpu as pltpu


def _biaffine_kernel(x_ref, w_ref, yt_ref, o_ref, xw_ref, *, n_chan):
    # x_ref : (1, TSx, Dx)      activations for this Sx tile
    # w_ref : (To, Dx, Dy)      bilinear weights for this channel block
    # yt_ref: (1, Dy, TSy)      y pre-transposed (no in-kernel transpose)
    # o_ref : (1, To, TSx, TSy)
    # xw_ref: (To, TSx, Dy)     X @ W hoisted out of the Sy loop, stored in
    #                           the compute dtype (cast happens ONCE here,
    #                           not on every sy step).
    @pl.when(pl.program_id(3) == 0)
    def _():
        x = x_ref[0]
        for t in range(n_chan):
            xw_ref[t] = jnp.dot(
                x, w_ref[t], preferred_element_type=jnp.float32
            ).astype(xw_ref.dtype)

    yt = yt_ref[0]
    for t in range(n_chan):
        o_ref[0, t] = jnp.dot(
            xw_ref[t], yt, preferred_element_type=jnp.float32
        ).astype(o_ref.dtype)


def _round_up(n, m):
    return ((n + m - 1) // m) * m


def _augment_features(t, add_ones, d_target):
    """Append the bias-ones column (if any) and zero-pad the feature dim to
    d_target in a single concatenate.  Exact: the matching padded rows/cols
    of the weight are zero."""
    parts = [t]
    if add_ones:
        parts.append(jnp.ones_like(t[..., :1]))
    pad = d_target - (t.shape[-1] + int(add_ones))
    if pad:
        parts.append(jnp.zeros(t.shape[:-1] + (pad,), t.dtype))
    return jnp.concatenate(parts, axis=-1) if len(parts) > 1 else t


def biaffine_pallas(x, y, weight, *, bias_x=True, bias_y=True,
                    tile_sx=512, tile_sy=512, max_out_block=8,
                    compute_dtype=jnp.bfloat16, out_dtype=None,
                    channels_last=True,
                    weight_buffer_count=None, y_buffer_count=None):
    """x: (B, Sx, n_in), y: (B, Sy, n_in), weight: (n_out, n_in+bx, n_in+by).
    Returns (B, Sx, Sy, n_out) (channels_last=True, matching the torch
    module) or (B, n_out, Sx, Sy) (channels_last=False, no trailing permute).

    Note: the default bf16 compute path rounds the X@W intermediate to bf16
    before the second matmul (accumulation stays f32); pass
    compute_dtype=jnp.float32 for bit-faithful f32 results."""
    B, Sx, n_in = x.shape
    _, Sy, _ = y.shape
    n_out, Dx, Dy = weight.shape
    assert Dx == n_in + int(bias_x) and Dy == n_in + int(bias_y)

    out_dtype = jnp.dtype(out_dtype) if out_dtype is not None else x.dtype
    cdt = jnp.dtype(compute_dtype) if compute_dtype is not None else x.dtype
    x = x.astype(cdt)
    y = y.astype(cdt)
    weight = weight.astype(cdt)

    c_size = cdt.itemsize
    o_size = jnp.dtype(out_dtype).itemsize
    sub = 8 * max(1, 4 // c_size)       # sublane granularity: 8 f32, 16 bf16

    # Feature dims: Dx is the lane dim of x (pad to 128); Dy is only the K /
    # sublane dim of the dominant matmul, so pad it just to sublane grain.
    Dxp = _round_up(Dx, 128)
    Dyp = _round_up(Dy, sub)
    x = _augment_features(x, bias_x, Dxp)
    y = _augment_features(y, bias_y, Dyp)

    # ---- VMEM-aware tile / out-channel-block selection --------------------
    try:
        vmem_cap = int(getattr(pltpu.get_tpu_info(), "vmem_capacity_bytes",
                               64 << 20))
    except Exception:
        vmem_cap = 64 << 20             # conservative fallback (v7x per-core)
    budget = max(vmem_cap - (16 << 20), 24 << 20)

    tsx = _round_up(min(Sx, tile_sx), sub)
    tsy = _round_up(min(Sy, tile_sy), 128)   # lane-dense output stores
    To = max(1, min(n_out, max_out_block))

    def _vmem_need(to, tx, ty):
        return (2 * tx * Dxp * c_size            # x tile  (double buffered)
                + 2 * to * Dxp * Dyp * c_size    # weight block
                + 2 * Dyp * ty * c_size          # yt tile
                + 2 * to * tx * ty * o_size      # output tile (out dtype!)
                + to * tx * Dyp * c_size)        # X@W scratch

    while _vmem_need(To, tsx, tsy) > budget and To > 1:
        To = max(1, To // 2)
    while _vmem_need(To, tsx, tsy) > budget and tsy > 128:
        tsy = max(128, _round_up(tsy // 2, 128))
    while _vmem_need(To, tsx, tsy) > budget and tsx > sub:
        tsx = max(sub, _round_up(tsx // 2, sub))

    # Prefer an exact divisor of n_out (no wasted padded output channels)
    # unless it would cost more than half of the channel block.
    for d in range(To, 0, -1):
        if n_out % d == 0:
            if d * 2 > To:
                To = d
            break
    n_out_p = _round_up(n_out, To)
    n_ob = n_out_p // To

    Sxp = _round_up(Sx, tsx)
    nsx = Sxp // tsx
    # Guarantee >=2 units of "parallel" work so both v7x TensorCores are used.
    if B * n_ob * nsx == 1 and Sx > sub:
        tsx = _round_up(-(-Sx // 2), sub)
        Sxp = _round_up(Sx, tsx)
        nsx = Sxp // tsx
    Syp = _round_up(Sy, tsy)
    nsy = Syp // tsy

    # ---- wrapper-side padding / transpose ---------------------------------
    if Sxp != Sx:
        x = jnp.pad(x, ((0, 0), (0, Sxp - Sx), (0, 0)))
    if Syp != Sy:
        y = jnp.pad(y, ((0, 0), (0, Syp - Sy), (0, 0)))
    if (n_out_p, Dxp, Dyp) != (n_out, Dx, Dy):
        weight = jnp.pad(weight, ((0, n_out_p - n_out),
                                  (0, Dxp - Dx), (0, Dyp - Dy)))
    yt = jnp.transpose(y, (0, 2, 1))          # (B, Dyp, Syp): kernel RHS ready

    est = _vmem_need(To, tsx, tsy)
    vmem_limit = int(max(min(est + (8 << 20), vmem_cap - (8 << 20)),
                         32 << 20))

    w_kwargs = {}
    if weight_buffer_count is not None:       # e.g. 1 on v7x for very large D
        w_kwargs["pipeline_mode"] = pl.Buffered(weight_buffer_count)
    y_kwargs = {}
    if y_buffer_count is not None:            # e.g. 3 on v5e to hide slow HBM
        y_kwargs["pipeline_mode"] = pl.Buffered(y_buffer_count)

    out = pl.pallas_call(
        functools.partial(_biaffine_kernel, n_chan=To),
        out_shape=jax.ShapeDtypeStruct((B, n_out_p, Sxp, Syp), out_dtype),
        grid_spec=pltpu.PrefetchScalarGridSpec(
            num_scalar_prefetch=0,
            # (B, sx, o, sy): x streamed once (its index_map ignores o); only
            # the small weight block is re-fetched per o; sy innermost and
            # "arbitrary" so the X@W hoist (keyed on program_id(3)==0) holds.
            grid=(B, nsx, n_ob, nsy),
            in_specs=[
                pl.BlockSpec((1, tsx, Dxp), lambda b, i, o, j: (b, i, 0)),
                pl.BlockSpec((To, Dxp, Dyp), lambda b, i, o, j: (o, 0, 0),
                             **w_kwargs),
                pl.BlockSpec((1, Dyp, tsy), lambda b, i, o, j: (b, 0, j),
                             **y_kwargs),
            ],
            out_specs=pl.BlockSpec((1, To, tsx, tsy),
                                   lambda b, i, o, j: (b, o, i, j)),
            scratch_shapes=[pltpu.VMEM((To, tsx, Dyp), cdt)],
        ),
        compiler_params=pltpu.CompilerParams(
            dimension_semantics=("parallel", "parallel", "parallel",
                                 "arbitrary"),
            vmem_limit_bytes=vmem_limit,
        ),
    )(x, weight, yt)

    out = out[:, :n_out, :Sx, :Sy]
    if not channels_last:
        return out                             # (B, n_out, Sx, Sy), no permute
    if n_out == 1:
        return out.reshape(B, Sx, Sy, 1)       # pure reshape, no transpose
    # TODO(synk): for n_out > 1 the channels-last permute stays an XLA-level
    # transpose; prefer channels_last=False and fuse the layout into the
    # consumer to avoid re-reading/re-writing the full score tensor.
    return jnp.transpose(out, (0, 2, 3, 1))


def init_biaffine_weight(key, n_in, n_out=1, bias_x=True, bias_y=True,
                         dtype=jnp.float32):
    """Xavier-normal init matching torch's fan computation for a
    (n_out, n_in+bx, n_in+by) tensor."""
    dx = n_in + int(bias_x)
    dy = n_in + int(bias_y)
    std = math.sqrt(2.0 / (dx * dy + n_out * dy))
    return std * jax.random.normal(key, (n_out, dx, dy), dtype=dtype)


def biaffine_reference(x, y, weight, *, bias_x=True, bias_y=True):
    if bias_x:
        x = jnp.concatenate([x, jnp.ones_like(x[..., :1])], axis=-1)
    if bias_y:
        y = jnp.concatenate([y, jnp.ones_like(y[..., :1])], axis=-1)
    s = jnp.einsum('bxi,oij,byj->boxy', x, weight, y)
    return jnp.transpose(s, (0, 2, 3, 1))


if __name__ == "__main__":
    def _bf16(t):  # round inputs to bf16 so the reference matches the bf16 path
        return t.astype(jnp.bfloat16).astype(jnp.float32)

    # --- test 1: default bf16 compute path, To == n_out, tiny shapes --------
    B, S, n_in, n_out = 2, 8, 32, 2
    kx, ky, kw = jax.random.split(jax.random.PRNGKey(0), 3)
    x = jax.random.normal(kx, (B, S, n_in), dtype=jnp.float32)
    y = jax.random.normal(ky, (B, S, n_in), dtype=jnp.float32)
    w = init_biaffine_weight(kw, n_in, n_out)

    out = jax.block_until_ready(biaffine_pallas(x, y, w))
    ref = biaffine_reference(_bf16(x), _bf16(y), _bf16(w))
    assert out.shape == (B, S, S, n_out), out.shape
    assert jnp.allclose(out, ref, atol=5e-2, rtol=5e-2), "mismatch (test 1)"

    # --- test 2: exact f32 path; exercises Sx/Sy tiling + padding, Dy
    #             sublane-padding, channel blocking with padded n_out ---------
    B2, Sx2, Sy2, n_in2, n_out2 = 1, 24, 300, 16, 3
    k1, k2, k3 = jax.random.split(jax.random.PRNGKey(1), 3)
    x2 = jax.random.normal(k1, (B2, Sx2, n_in2), dtype=jnp.float32)
    y2 = jax.random.normal(k2, (B2, Sy2, n_in2), dtype=jnp.float32)
    w2 = init_biaffine_weight(k3, n_in2, n_out2)

    out2 = jax.block_until_ready(
        biaffine_pallas(x2, y2, w2, compute_dtype=jnp.float32,
                        tile_sx=16, tile_sy=128, max_out_block=2))
    ref2 = biaffine_reference(x2, y2, w2)
    assert out2.shape == (B2, Sx2, Sy2, n_out2), out2.shape
    assert jnp.allclose(out2, ref2, atol=1e-4, rtol=1e-4), "mismatch (test 2)"

    # --- test 3: n_out == 1 reshape path + two-TensorCore Sx split ----------
    B3, Sx3, Sy3, n_in3 = 1, 20, 16, 8
    k4, k5, k6 = jax.random.split(jax.random.PRNGKey(2), 3)
    x3 = jax.random.normal(k4, (B3, Sx3, n_in3), dtype=jnp.float32)
    y3 = jax.random.normal(k5, (B3, Sy3, n_in3), dtype=jnp.float32)
    w3 = init_biaffine_weight(k6, n_in3, 1)

    out3 = jax.block_until_ready(biaffine_pallas(x3, y3, w3))
    ref3 = biaffine_reference(_bf16(x3), _bf16(y3), _bf16(w3))
    assert out3.shape == (B3, Sx3, Sy3, 1), out3.shape
    assert jnp.allclose(out3, ref3, atol=5e-2, rtol=5e-2), "mismatch (test 3)"

    print("KERNEL_OK")
</pallas_src>

<mosaic_0001>
module attributes {stable_mosaic.version = 11 : i64} {
  func.func @_biaffine_kernel(%arg0: i32, %arg1: i32, %arg2: i32, %arg3: i32, %arg4: memref<1x16x128xbf16, #tpu.memory_space<vmem>>, %arg5: memref<2x128x48xbf16, #tpu.memory_space<vmem>>, %arg6: memref<1x48x128xbf16, #tpu.memory_space<vmem>>, %arg7: memref<1x2x16x128xf32, #tpu.memory_space<vmem>>, %arg8: memref<2x16x48xbf16, #tpu.memory_space<vmem>>) attributes {dimension_semantics = [#tpu.dimension_semantics<parallel>, #tpu.dimension_semantics<parallel>, #tpu.dimension_semantics<parallel>, #tpu.dimension_semantics<arbitrary>], iteration_bounds = array<i64: 2, 1, 1, 1>, scalar_prefetch = 0 : i64, scratch_operands = 1 : i64, tpu.core_type = #tpu.core_type<tc>, window_params = [{transform_indices = @transform_0, window_bounds = array<i64: 1, 16, 128>}, {transform_indices = @transform_1, window_bounds = array<i64: 2, 128, 48>}, {transform_indices = @transform_2, window_bounds = array<i64: 1, 48, 128>}, {transform_indices = @transform_3, window_bounds = array<i64: 1, 2, 16, 128>}]} {
    %c0_i32 = arith.constant 0 : i32
    %0 = arith.cmpi eq, %arg3, %c0_i32 : i32
    %1 = arith.extui %0 : i1 to i32
    %c0_i32_0 = arith.constant 0 : i32
    %2 = arith.cmpi ne, %1, %c0_i32_0 : i32
    scf.if %2 {
      %c0_17 = arith.constant 0 : index
      %c0_18 = arith.constant 0 : index
      %c0_19 = arith.constant 0 : index
      %17 = vector.load %arg4[%c0_17, %c0_18, %c0_19] : memref<1x16x128xbf16, #tpu.memory_space<vmem>>, vector<1x16x128xbf16>
      %18 = vector.shape_cast %17 : vector<1x16x128xbf16> to vector<16x128xbf16>
      %c0_20 = arith.constant 0 : index
      %c0_21 = arith.constant 0 : index
      %c0_22 = arith.constant 0 : index
      %19 = vector.load %arg5[%c0_20, %c0_21, %c0_22] : memref<2x128x48xbf16, #tpu.memory_space<vmem>>, vector<1x128x48xbf16>
      %20 = vector.shape_cast %19 : vector<1x128x48xbf16> to vector<128x48xbf16>
      %cst_23 = arith.constant dense<0.000000e+00> : vector<16x48xf32>
      %21 = tpu.matmul %18, %20, %cst_23 {dimension_numbers = #tpu.dot_dimension_numbers<[1], [0], [0], [1], [0, 0, 1, 1], [], []>} : vector<16x128xbf16>, vector<128x48xbf16>, vector<16x48xf32> -> vector<16x48xf32>
      %22 = arith.truncf %21 : vector<16x48xf32> to vector<16x48xbf16>
      %c0_24 = arith.constant 0 : index
      %c0_25 = arith.constant 0 : index
      %c0_26 = arith.constant 0 : index
      %23 = vector.load %arg8[%c0_24, %c0_25, %c0_26] : memref<2x16x48xbf16, #tpu.memory_space<vmem>>, vector<1x16x48xbf16>
      %24 = vector.shape_cast %23 : vector<1x16x48xbf16> to vector<16x48xbf16>
      %25 = vector.shape_cast %22 : vector<16x48xbf16> to vector<1x16x48xbf16>
      tpu.vector_store %arg8[%c0_24, %c0_25, %c0_26], %25 {strides = array<i32>} : memref<2x16x48xbf16, #tpu.memory_space<vmem>>, vector<1x16x48xbf16>,
      %c1_27 = arith.constant 1 : index
      %c0_28 = arith.constant 0 : index
      %c0_29 = arith.constant 0 : index
      %26 = vector.load %arg5[%c1_27, %c0_28, %c0_29] : memref<2x128x48xbf16, #tpu.memory_space<vmem>>, vector<1x128x48xbf16>
      %27 = vector.shape_cast %26 : vector<1x128x48xbf16> to vector<128x48xbf16>
      %cst_30 = arith.constant dense<0.000000e+00> : vector<16x48xf32>
      %28 = tpu.matmul %18, %27, %cst_30 {dimension_numbers = #tpu.dot_dimension_numbers<[1], [0], [0], [1], [0, 0, 1, 1], [], []>} : vector<16x128xbf16>, vector<128x48xbf16>, vector<16x48xf32> -> vector<16x48xf32>
      %29 = arith.truncf %28 : vector<16x48xf32> to vector<16x48xbf16>
      %c1_31 = arith.constant 1 : index
      %c0_32 = arith.constant 0 : index
      %c0_33 = arith.constant 0 : index
      %30 = vector.load %arg8[%c1_31, %c0_32, %c0_33] : memref<2x16x48xbf16, #tpu.memory_space<vmem>>, vector<1x16x48xbf16>
      %31 = vector.shape_cast %30 : vector<1x16x48xbf16> to vector<16x48xbf16>
      %32 = vector.shape_cast %29 : vector<16x48xbf16> to vector<1x16x48xbf16>
      tpu.vector_store %arg8[%c1_31, %c0_32, %c0_33], %32 {strides = array<i32>} : memref<2x16x48xbf16, #tpu.memory_space<vmem>>, vector<1x16x48xbf16>,
    } else {
    }
    %c0 = arith.constant 0 : index
    %c0_1 = arith.constant 0 : index
    %c0_2 = arith.constant 0 : index
    %3 = vector.load %arg6[%c0, %c0_1, %c0_2] : memref<1x48x128xbf16, #tpu.memory_space<vmem>>, vector<1x48x128xbf16>
    %4 = vector.shape_cast %3 : vector<1x48x128xbf16> to vector<48x128xbf16>
    %c0_3 = arith.constant 0 : index
    %c0_4 = arith.constant 0 : index
    %c0_5 = arith.constant 0 : index
    %5 = vector.load %arg8[%c0_3, %c0_4, %c0_5] : memref<2x16x48xbf16, #tpu.memory_space<vmem>>, vector<1x16x48xbf16>
    %6 = vector.shape_cast %5 : vector<1x16x48xbf16> to vector<16x48xbf16>
    %cst = arith.constant dense<0.000000e+00> : vector<16x128xf32>
    %7 = tpu.matmul %6, %4, %cst {dimension_numbers = #tpu.dot_dimension_numbers<[1], [0], [0], [1], [0, 0, 1, 1], [], []>} : vector<16x48xbf16>, vector<48x128xbf16>, vector<16x128xf32> -> vector<16x128xf32>
    %c0_6 = arith.constant 0 : index
    %c0_7 = arith.constant 0 : index
    %c0_8 = arith.constant 0 : index
    %c0_9 = arith.constant 0 : index
    %8 = vector.load %arg7[%c0_6, %c0_7, %c0_8, %c0_9] : memref<1x2x16x128xf32, #tpu.memory_space<vmem>>, vector<1x1x16x128xf32>
    %9 = vector.shape_cast %8 : vector<1x1x16x128xf32> to vector<16x128xf32>
    %10 = vector.shape_cast %7 : vector<16x128xf32> to vector<1x1x16x128xf32>
    tpu.vector_store %arg7[%c0_6, %c0_7, %c0_8, %c0_9], %10 {strides = array<i32>} : memref<1x2x16x128xf32, #tpu.memory_space<vmem>>, vector<1x1x16x128xf32>,
    %c1 = arith.constant 1 : index
    %c0_10 = arith.constant 0 : index
    %c0_11 = arith.constant 0 : index
    %11 = vector.load %arg8[%c1, %c0_10, %c0_11] : memref<2x16x48xbf16, #tpu.memory_space<vmem>>, vector<1x16x48xbf16>
    %12 = vector.shape_cast %11 : vector<1x16x48xbf16> to vector<16x48xbf16>
    %cst_12 = arith.constant dense<0.000000e+00> : vector<16x128xf32>
    %13 = tpu.matmul %12, %4, %cst_12 {dimension_numbers = #tpu.dot_dimension_numbers<[1], [0], [0], [1], [0, 0, 1, 1], [], []>} : vector<16x48xbf16>, vector<48x128xbf16>, vector<16x128xf32> -> vector<16x128xf32>
    %c0_13 = arith.constant 0 : index
    %c1_14 = arith.constant 1 : index
    %c0_15 = arith.constant 0 : index
    %c0_16 = arith.constant 0 : index
    %14 = vector.load %arg7[%c0_13, %c1_14, %c0_15, %c0_16] : memref<1x2x16x128xf32, #tpu.memory_space<vmem>>, vector<1x1x16x128xf32>
    %15 = vector.shape_cast %14 : vector<1x1x16x128xf32> to vector<16x128xf32>
    %16 = vector.shape_cast %13 : vector<16x128xf32> to vector<1x1x16x128xf32>
    tpu.vector_store %arg7[%c0_13, %c1_14, %c0_15, %c0_16], %16 {strides = array<i32>} : memref<1x2x16x128xf32, #tpu.memory_space<vmem>>, vector<1x1x16x128xf32>,
    return
  }
  func.func @transform_0(%arg0: i32, %arg1: i32, %arg2: i32, %arg3: i32) -> (i32, i32, i32) {
    %c0_i32 = arith.constant 0 : i32
    %c0_i32_0 = arith.constant 0 : i32
    return %arg0, %arg1, %c0_i32 : i32, i32, i32
  }
  func.func @transform_1(%arg0: i32, %arg1: i32, %arg2: i32, %arg3: i32) -> (i32, i32, i32) {
    %c0_i32 = arith.constant 0 : i32
    %c0_i32_0 = arith.constant 0 : i32
    %c0_i32_1 = arith.constant 0 : i32
    return %arg2, %c0_i32, %c0_i32_0 : i32, i32, i32
  }
  func.func @transform_2(%arg0: i32, %arg1: i32, %arg2: i32, %arg3: i32) -> (i32, i32, i32) {
    %c0_i32 = arith.constant 0 : i32
    %c0_i32_0 = arith.constant 0 : i32
    return %arg0, %c0_i32, %arg3 : i32, i32, i32
  }
  func.func @transform_3(%arg0: i32, %arg1: i32, %arg2: i32, %arg3: i32) -> (i32, i32, i32, i32) {
    %c0_i32 = arith.constant 0 : i32
    return %arg0, %arg2, %arg1, %arg3 : i32, i32, i32, i32
  }
}

</mosaic_0001>

<llo_original>
// kernel: tpu_custom_call.1
$region0: #{tpu_custom_call.1}
  #allocation0 [shape = 'u32[]', space=smem, size = 0x4, offset = 0x4, fixed_abs, tag = 'smem constant byte address 0x4 - core index']
  #allocation1 [shape = 'u32[144,128]{1,0:T(1,128)}', space=vmem, size = 0x12000, scoped, tag = 'internal scratch']
  #allocation2 [shape = 'bf16[2,16,48]{2,1,0:T(16,128)(2,1)}', space=vmem, size = 0x2000, scoped, tag = 'scratch operand']
  %s0 = inlined_call_operand.vmem [shape: bf16[2,16,128], index: 0, kind: input, shape index: {}]
  %s1 = inlined_call_operand.vmem [shape: bf16[2,128,48], index: 1, kind: input, shape index: {}]
  %s2 = inlined_call_operand.vmem [shape: bf16[2,48,128], index: 2, kind: input, shape index: {}]
  %s3 = inlined_call_operand.hbm [shape: f32[2,2,16,128], index: 3, kind: output, shape index: {}]
  %s4 = sld [smem:[#allocation0]]
  $region49: #{tpu_custom_call.1} parent=0
    _
  %s6 = ssub.s32 1, %s4
  %s7 = scalar_select 0, %s6, %s4
  $region1: #{tpu_custom_call.1} parent=0
    #allocation3 [shape = 'u8[32768]{0}', space=vmem, size = 0x8000, scoped, tag = 'output window, operand 0']
    #allocation4 [shape = 's32[2]{0}', space=sflag, size = 0x8, scoped, tag = 'scoped memory for tpu_custom_call.1']
    %8 = vsyncpa [#allocation4], 0
    %s9 = scalar_lea.sflag [#allocation4], 1
    %10 = vsyncpa %s9, 0
    loop: start=0, step=1, limit=4
    $region2: #{tpu_custom_call.1} parent=1 // loop_pre_header
      _
    $region3: #{tpu_custom_call.1} parent=1 // loop_header
      %s12 = sphi 0, %s16
      %p13 = scmp.ge.s32.totalorder %s12, 4
      %s19 = sphi 0, %s45
      %s20 = sphi 0, %s41
      %s21 = sphi 0, %s37
      %s22 = sphi 0, %s33
      %s23 = sphi 0, %s19
      %s24 = sphi 0, %s20
      %s25 = sphi 0, %s21
      %s26 = sphi 0, %s22
      %s27 = sphi 0, %s23
      %s28 = sphi 0, %s24
      %s29 = sphi 0, %s25
      %s30 = sphi 0, %s26
      %s50 = sphi 0, %s52
      %s53 = sphi 0, %s50
      %s54 = sphi 0, %s53
      %s70 = sphi 0, %s54
      %s76 = sphi 0, %s78
      %s79 = sphi 0, %s76
      %s80 = sphi 0, %s79
      %s96 = sphi 0, %s80
      %s104 = sphi 0, %s106
      %s107 = sphi 0, %s104
      %s108 = sphi 0, %s107
      %s124 = sphi 0, %s108
      %s136 = sphi 0, %s138
      %s139 = sphi 0, %s136
      %s140 = sphi 0, %s139
      %s156 = sphi 0, %s140
    $region4: #{tpu_custom_call.1} parent=1 // loop_header_branch
      %15 = sbr.rel (%p13) target = $region8
    $region5: #{tpu_custom_call.1} parent=1 // loop_body
      %s17 = ssub.s32 %s12, 1
      %s18 = ssub.s32 %s12, 2
      %s31 = sadd.s32 1, %s22
      %p32 = scmp.ge.s32.totalorder %s31, 1
      %s33 = scalar_select %p32, 0, %s31
      %s34 = sadd.s32 1, %s21
      %s35 = scalar_select %p32, %s34, %s21
      %p36 = scmp.ge.s32.totalorder %s35, 1
      %s37 = scalar_select %p36, 0, %s35
      %s38 = sadd.s32 1, %s20
      %s39 = scalar_select %p36, %s38, %s20
      %p40 = scmp.ge.s32.totalorder %s39, 1
      %s41 = scalar_select %p40, 0, %s39
      %s42 = sadd.s32 1, %s19
      %s43 = scalar_select %p40, %s42, %s19
      %p44 = scmp.ge.s32.totalorder %s43, 2
      %s45 = scalar_select %p44, 0, %s43
      %s46 = ssub.s32 %s19, %s45
      %s47 = ssub.s32 %s20, %s41
      %s48 = sor.u32 %s46, %s47
      %p49 = scmp.eq.s32.totalorder %s48, 0
      %s51 = sadd.s32 %s50, 1
      %s52 = scalar_select %p49, %s50, %s51
      %p55 = pneg %p49
      %p56 = scmp.eq.s32.totalorder %s12, 1
      %p57 = por %p55, %p56
      %p58 = scmp.ne.s32.totalorder %s50, %s53
      %p59 = scmp.eq.s32.totalorder %s12, 0
      %p60 = por %p58, %p59
      %p61 = scmp.ne.s32.totalorder %s50, %s53
      %p62 = scmp.eq.s32.totalorder %s17, 1
      %p63 = por %p61, %p62
      %p64 = scmp.ne.s32.totalorder %s53, %s54
      %p65 = scmp.eq.s32.totalorder %s17, 0
      %p66 = por %p64, %p65
      %p67 = scmp.ne.s32.totalorder %s53, %s54
      %p68 = scmp.eq.s32.totalorder %s18, 1
      %p69 = por %p67, %p68
      %p71 = scmp.ne.s32.totalorder %s54, %s70
      %p72 = scmp.eq.s32.totalorder %s18, 0
      %p73 = por %p71, %p72
      %s74 = ssub.s32 %s21, %s37
      %p75 = scmp.eq.s32.totalorder %s74, 0
      %s77 = sadd.s32 %s76, 1
      %s78 = scalar_select %p75, %s76, %s77
      %p81 = pneg %p75
      %p82 = scmp.eq.s32.totalorder %s12, 1
      %p83 = por %p81, %p82
      %p84 = scmp.ne.s32.totalorder %s76, %s79
      %p85 = scmp.eq.s32.totalorder %s12, 0
      %p86 = por %p84, %p85
      %p87 = scmp.ne.s32.totalorder %s76, %s79
      %p88 = scmp.eq.s32.totalorder %s17, 1
      %p89 = por %p87, %p88
      %p90 = scmp.ne.s32.totalorder %s79, %s80
      %p91 = scmp.eq.s32.totalorder %s17, 0
      %p92 = por %p90, %p91
      %p93 = scmp.ne.s32.totalorder %s79, %s80
      %p94 = scmp.eq.s32.totalorder %s18, 1
      %p95 = por %p93, %p94
      %p97 = scmp.ne.s32.totalorder %s80, %s96
      %p98 = scmp.eq.s32.totalorder %s18, 0
      %p99 = por %p97, %p98
      %s100 = ssub.s32 %s19, %s45
      %s101 = ssub.s32 %s22, %s33
      %s102 = sor.u32 %s100, %s101
      %p103 = scmp.eq.s32.totalorder %s102, 0
      %s105 = sadd.s32 %s104, 1
      %s106 = scalar_select %p103, %s104, %s105
      %p109 = pneg %p103
      %p110 = scmp.eq.s32.totalorder %s12, 1
      %p111 = por %p109, %p110
      %p112 = scmp.ne.s32.totalorder %s104, %s107
      %p113 = scmp.eq.s32.totalorder %s12, 0
      %p114 = por %p112, %p113
      %p115 = scmp.ne.s32.totalorder %s104, %s107
      %p116 = scmp.eq.s32.totalorder %s17, 1
      %p117 = por %p115, %p116
      %p118 = scmp.ne.s32.totalorder %s107, %s108
      %p119 = scmp.eq.s32.totalorder %s17, 0
      %p120 = por %p118, %p119
      %p121 = scmp.ne.s32.totalorder %s107, %s108
      %p122 = scmp.eq.s32.totalorder %s18, 1
      %p123 = por %p121, %p122
      %p125 = scmp.ne.s32.totalorder %s108, %s124
      %p126 = scmp.eq.s32.totalorder %s18, 0
      %p127 = por %p125, %p126
      %s128 = ssub.s32 %s19, %s45
      %s129 = ssub.s32 %s21, %s37
      %s130 = sor.u32 %s128, %s129
      %s131 = ssub.s32 %s20, %s41
      %s132 = sor.u32 %s130, %s131
      %s133 = ssub.s32 %s22, %s33
      %s134 = sor.u32 %s132, %s133
      %p135 = scmp.eq.s32.totalorder %s134, 0
      %s137 = sadd.s32 %s136, 1
      %s138 = scalar_select %p135, %s136, %s137
      %p141 = pneg %p135
      %p142 = scmp.eq.s32.totalorder %s12, 1
      %p143 = por %p141, %p142
      %p144 = scmp.ne.s32.totalorder %s136, %s139
      %p145 = scmp.eq.s32.totalorder %s12, 0
      %p146 = por %p144, %p145
      %p147 = scmp.ne.s32.totalorder %s136, %s139
      %p148 = scmp.eq.s32.totalorder %s17, 1
      %p149 = por %p147, %p148
      %p150 = scmp.ne.s32.totalorder %s139, %s140
      %p151 = scmp.eq.s32.totalorder %s17, 0
      %p152 = por %p150, %p151
      %p153 = scmp.ne.s32.totalorder %s139, %s140
      %p154 = scmp.eq.s32.totalorder %s18, 1
      %p155 = por %p153, %p154
      %p157 = scmp.ne.s32.totalorder %s140, %s156
      %p158 = scmp.eq.s32.totalorder %s18, 0
      %p159 = por %p157, %p158
      %p160 = scmp.le.s32.totalorder 1, %s12
      %p161 = scmp.lt.s32.totalorder %s12, 3
      %p162 = pnand %p160, %p161
      %p163 = pneg %p162
      // Predicated region
      $region9: #{tpu_custom_call.1} parent=5 // pred_check
        _
      $region10: #{tpu_custom_call.1} parent=5 // pred_check_branch
        %165 = sbr.rel (%p162) target = $region12
      $region11: #{tpu_custom_call.1} parent=5 // pred_region
        %s166 = ssub.s32 %s12, 1
        // Predicated region
        $region13: #{tpu_custom_call.1} parent=11 // pred_check
          %p167 = pneg %p92
        $region14: #{tpu_custom_call.1} parent=11 // pred_check_branch
          %169 = sbr.rel (%p167) target = $region16
        $region15: #{tpu_custom_call.1} parent=11 // pred_region
          %s170 = smul.u32 2, %s25
          %p171 = scmp.lt.s32.totalorder %s170, 1
          %s172 = scalar_select %p171, %s170, 1
          %s173 = smul.addr %s172, 16
          %s174 = smul.addr %s173, 4
          %s175 = scalar_lea.vmem %s1, %s174
          %s176 = smul.u32 2, %s25
        $region16: #{tpu_custom_call.1} parent=11 // pred_fallthru
          _
      $region12: #{tpu_custom_call.1} parent=5 // pred_fallthru
        _
      %p177 = scmp.lt.s32.totalorder %s12, 2
      // Predicated region
      $region17: #{tpu_custom_call.1} parent=5 // pred_check
        %p178 = pneg %p177
      $region18: #{tpu_custom_call.1} parent=5 // pred_check_branch
        %180 = sbr.rel (%p178) target = $region20
      $region19: #{tpu_custom_call.1} parent=5 // pred_region
        // Predicated region
        $region21: #{tpu_custom_call.1} parent=19 // pred_check
          %p181 = pneg %p60
        $region22: #{tpu_custom_call.1} parent=19 // pred_check_branch
          %183 = sbr.rel (%p181) target = $region24
        $region23: #{tpu_custom_call.1} parent=19 // pred_region
          %s184 = smul.u32 2, %s20
          %p185 = scmp.lt.s32.totalorder %s19, 1
          %s186 = scalar_select %p185, %s19, 1
          %p187 = scmp.lt.s32.totalorder %s184, 1
          %s188 = scalar_select %p187, %s184, 1
          %s189 = smul.addr %s186, 2
          %s190 = sadd.s32 %s188, %s189
          %s191 = smul.addr %s190, 4
          %s192 = scalar_lea.vmem %s0, %s191
          %s193 = smul.u32 2, %s20
        $region24: #{tpu_custom_call.1} parent=19 // pred_fallthru
          _
        // Predicated region
        $region25: #{tpu_custom_call.1} parent=19 // pred_check
          %p194 = pneg %p114
        $region26: #{tpu_custom_call.1} parent=19 // pred_check_branch
          %196 = sbr.rel (%p194) target = $region28
        $region27: #{tpu_custom_call.1} parent=19 // pred_region
          %p197 = scmp.lt.s32.totalorder %s19, 1
          %s198 = scalar_select %p197, %s19, 1
          %p199 = scmp.lt.s32.totalorder %s22, 0
          %s200 = scalar_select %p199, %s22, 0
          %s201 = smul.addr %s198, 6
          %s202 = sadd.s32 %s200, %s201
          %s203 = smul.addr %s202, 4
          %s204 = scalar_lea.vmem %s2, %s203
        $region28: #{tpu_custom_call.1} parent=19 // pred_fallthru
          _
      $region20: #{tpu_custom_call.1} parent=5 // pred_fallthru
        _
      %p205 = scmp.le.s32.totalorder 1, %s12
      %p206 = scmp.lt.s32.totalorder %s12, 3
      %p207 = pnand %p205, %p206
      %p208 = pneg %p207
      // Predicated region
      $region29: #{tpu_custom_call.1} parent=5 // pred_check
        _
      $region30: #{tpu_custom_call.1} parent=5 // pred_check_branch
        %210 = sbr.rel (%p207) target = $region32
      $region31: #{tpu_custom_call.1} parent=5 // pred_region
        %s211 = ssub.s32 %s12, 1
        %s212 = smul.u32 2, %s24
        %p213 = scmp.lt.s32.totalorder %s23, 1
        %s214 = scalar_select %p213, %s23, 1
        %p215 = scmp.lt.s32.totalorder %s212, 1
        %s216 = scalar_select %p215, %s212, 1
        %s217 = smul.addr %s214, 2
        %s218 = sadd.s32 %s216, %s217
        %s219 = smul.addr %s218, 4
        %s220 = scalar_lea.vmem %s0, %s219
        %p221 = pneg %p66
        %p222 = pneg %p63
        %s223 = smul.u32 2, %s25
        %p224 = scmp.lt.s32.totalorder %s223, 1
        %s225 = scalar_select %p224, %s223, 1
        %s226 = smul.addr %s225, 16
        %s227 = smul.addr %s226, 4
        %s228 = scalar_lea.vmem %s1, %s227
        %p229 = pneg %p92
        %p230 = pneg %p89
        %p231 = scmp.lt.s32.totalorder %s23, 1
        %s232 = scalar_select %p231, %s23, 1
        %p233 = scmp.lt.s32.totalorder %s26, 0
        %s234 = scalar_select %p233, %s26, 0
        %s235 = smul.addr %s232, 6
        %s236 = sadd.s32 %s234, %s235
        %s237 = smul.addr %s236, 4
        %s238 = scalar_lea.vmem %s2, %s237
        %p239 = pneg %p120
        %p240 = pneg %p117
        %p241 = pneg %p152
        %p242 = pneg %p149
        %s243 = sand.u32 %s139, 1
        %s244 = scalar_lea.sflag [#allocation4], %s243
        %s245 = sand.u32 %s139, 1
        %s246 = smul.addr %s245, 32
        %s247 = scalar_lea.vmem [#allocation3], %s246
        %s248 = smul.u32 2, %s24
        %p249 = scmp.lt.s32.totalorder %s23, 1
        %s250 = scalar_select %p249, %s23, 1
        %p251 = scmp.lt.s32.totalorder %s248, 1
        %s252 = scalar_select %p251, %s248, 1
        %s253 = smul.addr %s250, 2
        %s254 = sadd.s32 %s252, %s253
        %s255 = smul.addr %s254, 4
        %s256 = scalar_lea.vmem %s0, %s255
        %s257 = smul.u32 2, %s24
        %s258 = smul.u32 2, %s25
        %p259 = scmp.lt.s32.totalorder %s258, 1
        %s260 = scalar_select %p259, %s258, 1
        %s261 = smul.addr %s260, 16
        %s262 = smul.addr %s261, 4
        %s263 = scalar_lea.vmem %s1, %s262
        %s264 = smul.u32 2, %s25
        %p265 = scmp.lt.s32.totalorder %s23, 1
        %s266 = scalar_select %p265, %s23, 1
        %p267 = scmp.lt.s32.totalorder %s26, 0
        %s268 = scalar_select %p267, %s26, 0
        %s269 = smul.addr %s266, 6
        %s270 = sadd.s32 %s268, %s269
        %s271 = smul.addr %s270, 4
        %s272 = scalar_lea.vmem %s2, %s271
        %s273 = smul.u32 2, %s25
        %s274 = smul.u32 2, %s24
        %p276 = scmp.eq.s32.totalorder %s26, 0
        // Predicated region
        $region33: #{tpu_custom_call.1} parent=31 // pred_check
          %p277 = pneg %p276
        $region34: #{tpu_custom_call.1} parent=31 // pred_check_branch
          %279 = sbr.rel (%p277) target = $region36
        $region35: #{tpu_custom_call.1} parent=31 // pred_region
          %v280 = vld [vmem:[%s256] sm:$0xf]
          %v281 = vld [vmem:[%s256 + $0x4] sm:$0xf]
          %v282 = vld [vmem:[%s263] sm:$0xf]
          %v283 = vld [vmem:[%s263 + $0x4] sm:$0xf]
          %v284 = vld [vmem:[%s263 + $0x8] sm:$0xf]
          %v285 = vld [vmem:[%s263 + $0xc] sm:$0xf]
          %v286 = vld [vmem:[%s263 + $0x10] sm:$0xf]
          %v287 = vld [vmem:[%s263 + $0x14] sm:$0xf]
          %v288 = vld [vmem:[%s263 + $0x18] sm:$0xf]
          %v289 = vld [vmem:[%s263 + $0x1c] sm:$0xf]
          %v290 = vld [vmem:[%s263 + $0x20] sm:$0xf]
          %v291 = vld [vmem:[%s263 + $0x24] sm:$0xf]
          %v292 = vld [vmem:[%s263 + $0x28] sm:$0xf]
          %v293 = vld [vmem:[%s263 + $0x2c] sm:$0xf]
          %v294 = vld [vmem:[%s263 + $0x30] sm:$0xf]
          %v295 = vld [vmem:[%s263 + $0x34] sm:$0xf]
          %v296 = vld [vmem:[%s263 + $0x38] sm:$0xf]
          %v297 = vld [vmem:[%s263 + $0x3c] sm:$0xf]
          %v300 = vunpack.c.l.b16 %v280
          %v301 = vunpack.c.l.b16 %v281
          %v302 = vpack.c.b16 %v301, %v300
          %v320 = vunpack.c.l.b16 %v282
          %v321 = vunpack.c.l.b16 %v283
          %v322 = vunpack.c.l.b16 %v284
          %v323 = vunpack.c.l.b16 %v285
          %v324 = vunpack.c.l.b16 %v286
          %v325 = vunpack.c.l.b16 %v287
          %v326 = vunpack.c.l.b16 %v288
          %v327 = vunpack.c.l.b16 %v289
          %v328 = vunpack.c.l.b16 %v290
          %v329 = vunpack.c.l.b16 %v291
          %v330 = vunpack.c.l.b16 %v292
          %v331 = vunpack.c.l.b16 %v293
          %v332 = vunpack.c.l.b16 %v294
          %v333 = vunpack.c.l.b16 %v295
          %v334 = vunpack.c.l.b16 %v296
          %v335 = vunpack.c.l.b16 %v297
          %v336 = vpack.c.b16 %v321, %v320
          %v337 = vpack.c.b16 %v323, %v322
          %v338 = vpack.c.b16 %v325, %v324
          %v339 = vpack.c.b16 %v327, %v326
          %v340 = vpack.c.b16 %v329, %v328
          %v341 = vpack.c.b16 %v331, %v330
          %v342 = vpack.c.b16 %v333, %v332
          %v343 = vpack.c.b16 %v335, %v334
          %352 = vmatprep.subr.bf16.mxu0 0
          %353 = vmatpush1.bf16.msra.mxu0 %v336
          %354 = vmatprep.subr.bf16.mxu0 0
          %355 = vmatpush1.bf16.msra.mxu0 %v337
          %356 = vmatprep.subr.bf16.mxu0 0
          %357 = vmatpush1.bf16.msra.mxu0 %v338
          %358 = vmatprep.subr.bf16.mxu0 0
          %359 = vmatpush1.bf16.msra.mxu0 %v339
          %360 = vmatprep.subr.bf16.mxu0 0
          %361 = vmatpush1.bf16.msra.mxu0 %v340
          %362 = vmatprep.subr.bf16.mxu0 0
          %363 = vmatpush1.bf16.msra.mxu0 %v341
          %364 = vmatprep.subr.bf16.mxu0 0
          %365 = vmatpush1.bf16.msra.mxu0 %v342
          %366 = vmatprep.subr.bf16.mxu0 0
          %367 = vmatpush1.bf16.msra.mxu0 %v343
          %368 = vmatprep.subr.bf16.mxu0 0
          %369 = vmatpush1.bf16.msra.mxu0 0
          %370 = vmatprep.subr.bf16.mxu0 0
          %371 = vmatpush1.bf16.msra.mxu0 0
          %372 = vmatprep.subr.bf16.mxu0 0
          %373 = vmatpush1.bf16.msra.mxu0 0
          %374 = vmatprep.subr.bf16.mxu0 0
          %375 = vmatpush1.bf16.msra.mxu0 0
          %376 = vmatprep.subr.bf16.mxu0 0
          %377 = vmatpush1.bf16.msra.mxu0 0
          %378 = vmatprep.subr.bf16.mxu0 0
          %379 = vmatpush1.bf16.msra.mxu0 0
          %380 = vmatprep.subr.bf16.mxu0 0
          %381 = vmatpush1.bf16.msra.mxu0 0
          %382 = vmatprep.subr.bf16.mxu0 0
          %383 = vmatpush1.bf16.msra.mxu0 0
          %384 = vmatprep.mubr.bf16.mxu0 0
          %385 = vmatmul.mubr.bf16.gmra.mrb[0].mxu0 %v302
          %v386 = vpop.f32.mrb[0].mxu0
          %v387 = vadd.f32 0.0, %v386
          %v388 = vpop.f32.mrb[0].mxu0
          %v389 = vpop.f32.mrb[0].mxu0
          %v390 = vadd.f32 0.0, %v389
          %v391 = vpop.f32.mrb[0].mxu0
          %392 = vdwg.mxu0
          %v393 = vpack.c.bf16 %v390, %v387
          %vm394 = vcmask 392192
          %395 = vst.msk [vmem:[#allocation2] sm:$0xff] %vm394, %v393
          %s396 = scalar_lea.vmem %s263, 64
          %v397 = vld [vmem:[%s396] sm:$0xf]
          %v398 = vld [vmem:[%s396 + $0x4] sm:$0xf]
          %v399 = vld [vmem:[%s396 + $0x8] sm:$0xf]
          %v400 = vld [vmem:[%s396 + $0xc] sm:$0xf]
          %v401 = vld [vmem:[%s396 + $0x10] sm:$0xf]
          %v402 = vld [vmem:[%s396 + $0x14] sm:$0xf]
          %v403 = vld [vmem:[%s396 + $0x18] sm:$0xf]
          %v404 = vld [vmem:[%s396 + $0x1c] sm:$0xf]
          %v405 = vld [vmem:[%s396 + $0x20] sm:$0xf]
          %v406 = vld [vmem:[%s396 + $0x24] sm:$0xf]
          %v407 = vld [vmem:[%s396 + $0x28] sm:$0xf]
          %v408 = vld [vmem:[%s396 + $0x2c] sm:$0xf]
          %v409 = vld [vmem:[%s396 + $0x30] sm:$0xf]
          %v410 = vld [vmem:[%s396 + $0x34] sm:$0xf]
          %v411 = vld [vmem:[%s396 + $0x38] sm:$0xf]
          %v412 = vld [vmem:[%s396 + $0x3c] sm:$0xf]
          %v429 = vunpack.c.l.b16 %v397
          %v430 = vunpack.c.l.b16 %v398
          %v431 = vunpack.c.l.b16 %v399
          %v432 = vunpack.c.l.b16 %v400
          %v433 = vunpack.c.l.b16 %v401
          %v434 = vunpack.c.l.b16 %v402
          %v435 = vunpack.c.l.b16 %v403
          %v436 = vunpack.c.l.b16 %v404
          %v437 = vunpack.c.l.b16 %v405
          %v438 = vunpack.c.l.b16 %v406
          %v439 = vunpack.c.l.b16 %v407
          %v440 = vunpack.c.l.b16 %v408
          %v441 = vunpack.c.l.b16 %v409
          %v442 = vunpack.c.l.b16 %v410
          %v443 = vunpack.c.l.b16 %v411
          %v444 = vunpack.c.l.b16 %v412
          %v445 = vpack.c.b16 %v430, %v429
          %v446 = vpack.c.b16 %v432, %v431
          %v447 = vpack.c.b16 %v434, %v433
          %v448 = vpack.c.b16 %v436, %v435
          %v449 = vpack.c.b16 %v438, %v437
          %v450 = vpack.c.b16 %v440, %v439
          %v451 = vpack.c.b16 %v442, %v441
          %v452 = vpack.c.b16 %v444, %v443
          %461 = vmatprep.subr.bf16.mxu0 0
          %462 = vmatpush1.bf16.msra.mxu0 %v445
          %463 = vmatprep.subr.bf16.mxu0 0
          %464 = vmatpush1.bf16.msra.mxu0 %v446
          %465 = vmatprep.subr.bf16.mxu0 0
          %466 = vmatpush1.bf16.msra.mxu0 %v447
          %467 = vmatprep.subr.bf16.mxu0 0
          %468 = vmatpush1.bf16.msra.mxu0 %v448
          %469 = vmatprep.subr.bf16.mxu0 0
          %470 = vmatpush1.bf16.msra.mxu0 %v449
          %471 = vmatprep.subr.bf16.mxu0 0
          %472 = vmatpush1.bf16.msra.mxu0 %v450
          %473 = vmatprep.subr.bf16.mxu0 0
          %474 = vmatpush1.bf16.msra.mxu0 %v451
          %475 = vmatprep.subr.bf16.mxu0 0
          %476 = vmatpush1.bf16.msra.mxu0 %v452
          %477 = vmatprep.subr.bf16.mxu0 0
          %478 = vmatpush1.bf16.msra.mxu0 0
          %479 = vmatprep.subr.bf16.mxu0 0
          %480 = vmatpush1.bf16.msra.mxu0 0
          %481 = vmatprep.subr.bf16.mxu0 0
          %482 = vmatpush1.bf16.msra.mxu0 0
          %483 = vmatprep.subr.bf16.mxu0 0
          %484 = vmatpush1.bf16.msra.mxu0 0
          %485 = vmatprep.subr.bf16.mxu0 0
          %486 = vmatpush1.bf16.msra.mxu0 0
          %487 = vmatprep.subr.bf16.mxu0 0
          %488 = vmatpush1.bf16.msra.mxu0 0
          %489 = vmatprep.subr.bf16.mxu0 0
          %490 = vmatpush1.bf16.msra.mxu0 0
          %491 = vmatprep.subr.bf16.mxu0 0
          %492 = vmatpush1.bf16.msra.mxu0 0
          %493 = vmatprep.mubr.bf16.mxu0 0
          %494 = vmatmul.mubr.bf16.gmra.mrb[0].mxu0 %v302
          %v495 = vpop.f32.mrb[0].mxu0
          %v496 = vadd.f32 0.0, %v495
          %v497 = vpop.f32.mrb[0].mxu0
          %v498 = vpop.f32.mrb[0].mxu0
          %v499 = vadd.f32 0.0, %v498
          %v500 = vpop.f32.mrb[0].mxu0
          %501 = vdwg.mxu0
          %v502 = vpack.c.bf16 %v499, %v496
          %s503 = scalar_lea.vmem [#allocation2], 8
          %504 = vst.msk [vmem:[%s503] sm:$0xff] %vm394, %v502
        $region36: #{tpu_custom_call.1} parent=31 // pred_fallthru
          _
        %v505 = vld [vmem:[%s272] sm:$0xf]
        %v506 = vld [vmem:[%s272 + $0x4] sm:$0xf]
        %v507 = vld [vmem:[%s272 + $0x8] sm:$0xf]
        %v508 = vld [vmem:[%s272 + $0xc] sm:$0xf]
        %v509 = vld [vmem:[%s272 + $0x10] sm:$0xf]
        %v510 = vld [vmem:[%s272 + $0x14] sm:$0xf]
        %v511 = vld [vmem:[#allocation2] sm:$0xff]
        %v518 = vunpack.c.l.b16 %v505
        %v519 = vunpack.c.l.b16 %v506
        %v520 = vunpack.c.l.b16 %v507
        %v521 = vunpack.c.l.b16 %v508
        %v522 = vunpack.c.l.b16 %v509
        %v523 = vunpack.c.l.b16 %v510
        %v524 = vpack.c.b16 %v519, %v518
        %v525 = vpack.c.b16 %v521, %v520
        %v526 = vpack.c.b16 %v523, %v522
        %vm530 = vcmask 392192
        %v532 = vsel %vm530, %v511, 0
        %534 = vmatprep.subr.bf16.mxu0 0
        %535 = vmatpush1.bf16.msra.mxu0 %v524
        %536 = vmatprep.subr.bf16.mxu0 0
        %537 = vmatpush1.bf16.msra.mxu0 %v525
        %538 = vmatprep.subr.bf16.mxu0 0
        %539 = vmatpush1.bf16.msra.mxu0 %v526
        %540 = vmatprep.subr.bf16.mxu0 0
        %541 = vmatpush1.bf16.msra.mxu0 0
        %542 = vmatprep.subr.bf16.mxu0 0
        %543 = vmatpush1.bf16.msra.mxu0 0
        %544 = vmatprep.subr.bf16.mxu0 0
        %545 = vmatpush1.bf16.msra.mxu0 0
        %546 = vmatprep.subr.bf16.mxu0 0
        %547 = vmatpush1.bf16.msra.mxu0 0
        %548 = vmatprep.subr.bf16.mxu0 0
        %549 = vmatpush1.bf16.msra.mxu0 0
        %550 = vmatprep.subr.bf16.mxu0 0
        %551 = vmatpush1.bf16.msra.mxu0 0
        %552 = vmatprep.subr.bf16.mxu0 0
        %553 = vmatpush1.bf16.msra.mxu0 0
        %554 = vmatprep.subr.bf16.mxu0 0
        %555 = vmatpush1.bf16.msra.mxu0 0
        %556 = vmatprep.subr.bf16.mxu0 0
        %557 = vmatpush1.bf16.msra.mxu0 0
        %558 = vmatprep.subr.bf16.mxu0 0
        %559 = vmatpush1.bf16.msra.mxu0 0
        %560 = vmatprep.subr.bf16.mxu0 0
        %561 = vmatpush1.bf16.msra.mxu0 0
        %562 = vmatprep.subr.bf16.mxu0 0
        %563 = vmatpush1.bf16.msra.mxu0 0
        %564 = vmatprep.subr.bf16.mxu0 0
        %565 = vmatpush1.bf16.msra.mxu0 0
        %566 = vmatprep.mubr.bf16.mxu0 0
        %567 = vmatmul.mubr.bf16.gmra.mrb[0].mxu0 %v532
        %v568 = vpop.f32.mrb[0].mxu0
        %v569 = vadd.f32 0.0, %v568
        %v570 = vpop.f32.mrb[0].mxu0
        %v571 = vpop.f32.mrb[0].mxu0
        %v572 = vadd.f32 0.0, %v571
        %v573 = vpop.f32.mrb[0].mxu0
        %574 = vdwg.mxu0
        %575 = vst [vmem:[%s247] sm:$0xff] %v569
        %576 = vst [vmem:[%s247 + $0x8] sm:$0xff] %v572
        %s577 = scalar_lea.vmem [#allocation2], 8
        %v578 = vld [vmem:[%s577] sm:$0xff]
        %v580 = vsel %vm530, %v578, 0
        %582 = vmatprep.subr.bf16.mxu0 0
        %583 = vmatpush1.bf16.msra.mxu0 %v524
        %584 = vmatprep.subr.bf16.mxu0 0
        %585 = vmatpush1.bf16.msra.mxu0 %v525
        %586 = vmatprep.subr.bf16.mxu0 0
        %587 = vmatpush1.bf16.msra.mxu0 %v526
        %588 = vmatprep.subr.bf16.mxu0 0
        %589 = vmatpush1.bf16.msra.mxu0 0
        %590 = vmatprep.subr.bf16.mxu0 0
        %591 = vmatpush1.bf16.msra.mxu0 0
        %592 = vmatprep.subr.bf16.mxu0 0
        %593 = vmatpush1.bf16.msra.mxu0 0
        %594 = vmatprep.subr.bf16.mxu0 0
        %595 = vmatpush1.bf16.msra.mxu0 0
        %596 = vmatprep.subr.bf16.mxu0 0
        %597 = vmatpush1.bf16.msra.mxu0 0
        %598 = vmatprep.subr.bf16.mxu0 0
        %599 = vmatpush1.bf16.msra.mxu0 0
        %600 = vmatprep.subr.bf16.mxu0 0
        %601 = vmatpush1.bf16.msra.mxu0 0
        %602 = vmatprep.subr.bf16.mxu0 0
        %603 = vmatpush1.bf16.msra.mxu0 0
        %604 = vmatprep.subr.bf16.mxu0 0
        %605 = vmatpush1.bf16.msra.mxu0 0
        %606 = vmatprep.subr.bf16.mxu0 0
        %607 = vmatpush1.bf16.msra.mxu0 0
        %608 = vmatprep.subr.bf16.mxu0 0
        %609 = vmatpush1.bf16.msra.mxu0 0
        %610 = vmatprep.subr.bf16.mxu0 0
        %611 = vmatpush1.bf16.msra.mxu0 0
        %612 = vmatprep.subr.bf16.mxu0 0
        %613 = vmatpush1.bf16.msra.mxu0 0
        %614 = vmatprep.mubr.bf16.mxu0 0
        %615 = vmatmul.mubr.bf16.gmra.mrb[0].mxu0 %v580
        %v616 = vpop.f32.mrb[0].mxu0
        %v617 = vadd.f32 0.0, %v616
        %v618 = vpop.f32.mrb[0].mxu0
        %v619 = vpop.f32.mrb[0].mxu0
        %v620 = vadd.f32 0.0, %v619
        %v621 = vpop.f32.mrb[0].mxu0
        %622 = vdwg.mxu0
        %s623 = scalar_lea.vmem %s247, 16 [#allocation3]
        %624 = vst [vmem:[%s623] sm:$0xff] %v617
        %625 = vst [vmem:[%s623 + $0x8] sm:$0xff] %v620
        %s626 = sand.u32 %s139, 1
        %s627 = scalar_lea.sflag [#allocation4], %s626
        %s628 = sand.u32 %s139, 1
        %s629 = smul.addr %s628, 32
        %s630 = scalar_lea.vmem [#allocation3], %s629
        // Predicated region
        $region37: #{tpu_custom_call.1} parent=31 // pred_check
          %p631 = pneg %p149
        $region38: #{tpu_custom_call.1} parent=31 // pred_check_branch
          %633 = sbr.rel (%p631) target = $region40
        $region39: #{tpu_custom_call.1} parent=31 // pred_region
          %s634 = smul.u32 2, %s25
          %s635 = smul.u32 2, %s24
          %s637 = ssub.s32 512, 512
          %638 = vsyncadd %s627, %s637
          %s639 = sadd.s32 %s26, %s635
          %s640 = smul.addr %s634, 2
          %s641 = sadd.s32 %s639, %s640
          %s642 = smul.addr %s23, 4
          %s643 = sadd.s32 %s641, %s642
          %s644 = smul.addr %s643, 128
          %s645 = scalar_lea.hbm %s3, %s644
          %s646 = sshll.u32 %s630, 4
          %s647 = int_to_ptr.vmem [resolvable:$true] %s646
          %652 = dma.vmem_to_hbm [thread:$0]  %s647, 512, %s645, %s627, 128, 128, 8
        $region40: #{tpu_custom_call.1} parent=31 // pred_fallthru
          _
      $region32: #{tpu_custom_call.1} parent=5 // pred_fallthru
        _
      %p653 = scmp.le.s32.totalorder 2, %s12
      // Predicated region
      $region41: #{tpu_custom_call.1} parent=5 // pred_check
        %p654 = pneg %p653
      $region42: #{tpu_custom_call.1} parent=5 // pred_check_branch
        %656 = sbr.rel (%p654) target = $region44
      $region43: #{tpu_custom_call.1} parent=5 // pred_region
        %s657 = ssub.s32 %s12, 2
        // Predicated region
        $region45: #{tpu_custom_call.1} parent=43 // pred_check
          %p658 = pneg %p155
        $region46: #{tpu_custom_call.1} parent=43 // pred_check_branch
          %660 = sbr.rel (%p658) target = $region48
        $region47: #{tpu_custom_call.1} parent=43 // pred_region
          %s661 = sand.u32 %s140, 1
          %s662 = scalar_lea.sflag [#allocation4], %s661
          %s663 = sand.u32 %s140, 1
          %s664 = smul.addr %s663, 32
          %s665 = scalar_lea.vmem [#allocation3], %s664
          %666 = dma.done %s662, 512
        $region48: #{tpu_custom_call.1} parent=43 // pred_fallthru
          _
      $region44: #{tpu_custom_call.1} parent=5 // pred_fallthru
        _
    $region6: #{tpu_custom_call.1} parent=1 // loop_footer
      %s16 = sadd.s32 1, %s12
    $region7: #{tpu_custom_call.1} parent=1 // loop_footer_branch
      %11 = sbr.rel target = $region3
    $region8: #{tpu_custom_call.1} parent=1 // loop_exit
      _
    %667 = vsyncpa [#allocation4], 1
    %s668 = scalar_lea.sflag [#allocation4], 1
    %669 = vsyncpa %s668, 1

</llo_original>
